<compile_context>
chip_gen: v7x
topology: tpu7x:2x2x1
jax: 0.10.0
libtpu: 0.0.40
codegen_flags: <defaults>
</compile_context>

<pallas_src>
import numpy as np
import jax
import jax.numpy as jnp
from jax.experimental import pallas as pl
from jax.experimental.pallas import tpu as pltpu


def gaussian_taps_1d(kernel_size: int, sigma: float) -> np.ndarray:
    """1-D Gaussian taps with peak == 1.  The module's peak-normalized 2-D
    kernel (k / k.max()) equals outer(taps, taps) for this analytic form,
    so the blur is exactly separable into two 1-D passes.
    # TODO(synk): scipy.ndimage.gaussian_filter (reflect boundary, truncate=4*sigma)
    # differs from this analytic kernel by a tiny reflected-tail mass.
    """
    c = kernel_size // 2
    xs = np.arange(kernel_size, dtype=np.float64) - c
    g = np.exp(-(xs ** 2) / (2.0 * float(sigma) ** 2))
    return g / g.max()


def gaussian_kernel_2d(kernel_size: int, sigma: float) -> np.ndarray:
    g = gaussian_taps_1d(kernel_size, sigma)
    return np.outer(g, g).astype(np.float32)


def _make_blur_kernel(B: int, H: int, W: int, K: int, taps):
    p = K // 2
    Hp, Wp = H + 2 * p, W + 2 * p
    taps = [float(t) for t in taps]  # trace-time immediates

    def blur_kernel(x_ref, o_ref, xpad_ref, tmp_ref, acc_ref):
        # x_ref:   (B, H, W)  input block (B = packed N*C planes)
        # o_ref:   (B, H, W)  output block
        # xpad_ref:(B, Hp, Wp) f32 VMEM scratch -- zero halo built in-kernel
        # tmp_ref: (B, Hp, W)  f32 VMEM scratch -- horizontal-pass result
        # acc_ref: (B, H, W)   f32 VMEM scratch -- vertical-pass accumulator

        # Build the zero-padded halo in VMEM (no HBM pad pass); cast once.
        xpad_ref[...] = jnp.zeros_like(xpad_ref)
        xpad_ref[:, p:p + H, p:p + W] = x_ref[...].astype(jnp.float32)

        # Horizontal (W) pass: K taps.
        tmp_ref[...] = taps[0] * xpad_ref[:, :, 0:W]
        for dj in range(1, K):
            tmp_ref[...] += taps[dj] * xpad_ref[:, :, dj:dj + W]

        # Vertical (H) pass: K taps.  Padded H rows of tmp are zero already
        # (they were computed from zero halo rows), giving correct zero padding.
        acc_ref[...] = taps[0] * tmp_ref[:, 0:H, :]
        for di in range(1, K):
            acc_ref[...] += taps[di] * tmp_ref[:, di:di + H, :]

        o_ref[...] = acc_ref[...].astype(o_ref.dtype)

    return blur_kernel


def gaussian_blur2d(x: jax.Array, kernel_size: int, sigma: float) -> jax.Array:
    """Depthwise 'same' conv with a shared peak-normalized Gaussian kernel,
    stride 1, zero padding K//2, no bias -- same semantics as the module."""
    N, C, H, W = x.shape
    K = kernel_size
    assert K % 2 == 1
    p = K // 2
    Hp, Wp = H + 2 * p, W + 2 * p
    NC = N * C

    taps = gaussian_taps_1d(K, sigma)
    xr = x.reshape(NC, H, W)  # free reshape: pack (n, c) planes along one axis
    itemsize = x.dtype.itemsize

    # Per-grid-step VMEM footprint (double-buffered I/O blocks + scratches).
    def footprint(b):
        io = 2 * b * H * W * itemsize * 2            # in + out, double-buffered
        scr = b * (Hp * Wp + Hp * W + H * W) * 4     # xpad + tmp + acc (f32)
        return io + scr

    budget = 24 * 1024 * 1024  # leaves headroom within v7x's 64 MiB VMEM
    b_blk = 1
    for b in range(NC, 0, -1):
        if NC % b != 0:
            continue
        if NC >= 2 and b > NC // 2:
            continue  # keep >=2 blocks along the parallel axis (v7x megacore)
        if footprint(b) <= budget:
            b_blk = b
            break
    # TODO(synk): if even a single plane exceeds the VMEM budget (very large
    # H*W), switch to H-strip tiling with a halo'd row index_map.
    grid = (NC // b_blk,)

    kernel = _make_blur_kernel(b_blk, H, W, K, taps)
    out = pl.pallas_call(
        kernel,
        out_shape=jax.ShapeDtypeStruct((NC, H, W), x.dtype),
        grid=grid,
        in_specs=[pl.BlockSpec((b_blk, H, W), lambda i: (i, 0, 0))],
        out_specs=pl.BlockSpec((b_blk, H, W), lambda i: (i, 0, 0)),
        scratch_shapes=[
            pltpu.VMEM((b_blk, Hp, Wp), jnp.float32),  # padded input plane(s)
            pltpu.VMEM((b_blk, Hp, W), jnp.float32),   # horizontal-pass result
            pltpu.VMEM((b_blk, H, W), jnp.float32),    # f32 accumulator
        ],
        compiler_params=pltpu.CompilerParams(
            dimension_semantics=("parallel",),
            vmem_limit_bytes=48 * 1024 * 1024),
    )(xr)
    return out.reshape(N, C, H, W)


if __name__ == "__main__":
    N, C, H, W = 2, 4, 16, 16
    KSIZE, SIGMA = 5, 3

    key = jax.random.PRNGKey(0)
    x = jax.random.normal(key, (N, C, H, W), dtype=jnp.float32)

    y = gaussian_blur2d(x, KSIZE, SIGMA)
    jax.block_until_ready(y)

    # Reference check: depthwise conv via lax (groups=C), identical filter per channel.
    w2d = jnp.asarray(gaussian_kernel_2d(KSIZE, SIGMA))
    wt = jnp.broadcast_to(w2d[None, None], (C, 1, KSIZE, KSIZE))
    ref = jax.lax.conv_general_dilated(
        x, wt, window_strides=(1, 1),
        padding=[(KSIZE // 2, KSIZE // 2)] * 2,
        dimension_numbers=("NCHW", "OIHW", "NCHW"),
        feature_group_count=C)
    assert y.shape == (N, C, H, W)
    assert jnp.allclose(y, ref, atol=1e-4, rtol=1e-4)

    print("KERNEL_OK")
</pallas_src>

<mosaic_0001>
module attributes {stable_mosaic.version = 11 : i64} {
  func.func @blur_kernel(%arg0: i32, %arg1: memref<4x16x16xf32, #tpu.memory_space<vmem>>, %arg2: memref<4x16x16xf32, #tpu.memory_space<vmem>>, %arg3: memref<4x20x20xf32, #tpu.memory_space<vmem>>, %arg4: memref<4x20x16xf32, #tpu.memory_space<vmem>>, %arg5: memref<4x16x16xf32, #tpu.memory_space<vmem>>) attributes {dimension_semantics = [#tpu.dimension_semantics<parallel>], iteration_bounds = array<i64: 2>, scalar_prefetch = 0 : i64, scratch_operands = 3 : i64, tpu.core_type = #tpu.core_type<tc>, window_params = [{transform_indices = @transform_0, window_bounds = array<i64: 4, 16, 16>}, {transform_indices = @transform_1, window_bounds = array<i64: 4, 16, 16>}]} {
    %cst = arith.constant 0.000000e+00 : f32
    %0 = vector.broadcast %cst : f32 to vector<4x20x20xf32>
    %c0 = arith.constant 0 : index
    %c0_0 = arith.constant 0 : index
    %c0_1 = arith.constant 0 : index
    %1 = vector.load %arg3[%c0, %c0_0, %c0_1] : memref<4x20x20xf32, #tpu.memory_space<vmem>>, vector<4x20x20xf32>
    tpu.vector_store %arg3[%c0, %c0_0, %c0_1], %0 {strides = array<i32>} : memref<4x20x20xf32, #tpu.memory_space<vmem>>, vector<4x20x20xf32>,
    %c0_2 = arith.constant 0 : index
    %c0_3 = arith.constant 0 : index
    %c0_4 = arith.constant 0 : index
    %2 = vector.load %arg1[%c0_2, %c0_3, %c0_4] : memref<4x16x16xf32, #tpu.memory_space<vmem>>, vector<4x16x16xf32>
    %c0_5 = arith.constant 0 : index
    %c2 = arith.constant 2 : index
    %c2_6 = arith.constant 2 : index
    %3 = vector.load %arg3[%c0_5, %c2, %c2_6] : memref<4x20x20xf32, #tpu.memory_space<vmem>>, vector<4x16x16xf32>
    tpu.vector_store %arg3[%c0_5, %c2, %c2_6], %2 {strides = array<i32>} : memref<4x20x20xf32, #tpu.memory_space<vmem>>, vector<4x16x16xf32>,
    %c0_7 = arith.constant 0 : index
    %c0_8 = arith.constant 0 : index
    %c0_9 = arith.constant 0 : index
    %4 = vector.load %arg3[%c0_7, %c0_8, %c0_9] : memref<4x20x20xf32, #tpu.memory_space<vmem>>, vector<4x20x16xf32>
    %cst_10 = arith.constant 0.800737381 : f32
    %5 = vector.broadcast %cst_10 : f32 to vector<4x20x16xf32>
    %6 = arith.mulf %5, %4 : vector<4x20x16xf32>
    %c0_11 = arith.constant 0 : index
    %c0_12 = arith.constant 0 : index
    %c0_13 = arith.constant 0 : index
    %7 = vector.load %arg4[%c0_11, %c0_12, %c0_13] : memref<4x20x16xf32, #tpu.memory_space<vmem>>, vector<4x20x16xf32>
    tpu.vector_store %arg4[%c0_11, %c0_12, %c0_13], %6 {strides = array<i32>} : memref<4x20x16xf32, #tpu.memory_space<vmem>>, vector<4x20x16xf32>,
    %c0_14 = arith.constant 0 : index
    %c0_15 = arith.constant 0 : index
    %c0_16 = arith.constant 0 : index
    %8 = vector.load %arg4[%c0_14, %c0_15, %c0_16] : memref<4x20x16xf32, #tpu.memory_space<vmem>>, vector<4x20x16xf32>
    %c0_17 = arith.constant 0 : index
    %c0_18 = arith.constant 0 : index
    %c1 = arith.constant 1 : index
    %9 = vector.load %arg3[%c0_17, %c0_18, %c1] : memref<4x20x20xf32, #tpu.memory_space<vmem>>, vector<4x20x16xf32>
    %cst_19 = arith.constant 0.945959448 : f32
    %10 = vector.broadcast %cst_19 : f32 to vector<4x20x16xf32>
    %11 = arith.mulf %10, %9 : vector<4x20x16xf32>
    %12 = arith.addf %8, %11 : vector<4x20x16xf32>
    %c0_20 = arith.constant 0 : index
    %c0_21 = arith.constant 0 : index
    %c0_22 = arith.constant 0 : index
    %13 = vector.load %arg4[%c0_20, %c0_21, %c0_22] : memref<4x20x16xf32, #tpu.memory_space<vmem>>, vector<4x20x16xf32>
    tpu.vector_store %arg4[%c0_20, %c0_21, %c0_22], %12 {strides = array<i32>} : memref<4x20x16xf32, #tpu.memory_space<vmem>>, vector<4x20x16xf32>,
    %c0_23 = arith.constant 0 : index
    %c0_24 = arith.constant 0 : index
    %c0_25 = arith.constant 0 : index
    %14 = vector.load %arg4[%c0_23, %c0_24, %c0_25] : memref<4x20x16xf32, #tpu.memory_space<vmem>>, vector<4x20x16xf32>
    %c0_26 = arith.constant 0 : index
    %c0_27 = arith.constant 0 : index
    %c2_28 = arith.constant 2 : index
    %15 = vector.load %arg3[%c0_26, %c0_27, %c2_28] : memref<4x20x20xf32, #tpu.memory_space<vmem>>, vector<4x20x16xf32>
    %cst_29 = arith.constant 1.000000e+00 : f32
    %16 = vector.broadcast %cst_29 : f32 to vector<4x20x16xf32>
    %17 = arith.mulf %16, %15 : vector<4x20x16xf32>
    %18 = arith.addf %14, %17 : vector<4x20x16xf32>
    %c0_30 = arith.constant 0 : index
    %c0_31 = arith.constant 0 : index
    %c0_32 = arith.constant 0 : index
    %19 = vector.load %arg4[%c0_30, %c0_31, %c0_32] : memref<4x20x16xf32, #tpu.memory_space<vmem>>, vector<4x20x16xf32>
    tpu.vector_store %arg4[%c0_30, %c0_31, %c0_32], %18 {strides = array<i32>} : memref<4x20x16xf32, #tpu.memory_space<vmem>>, vector<4x20x16xf32>,
    %c0_33 = arith.constant 0 : index
    %c0_34 = arith.constant 0 : index
    %c0_35 = arith.constant 0 : index
    %20 = vector.load %arg4[%c0_33, %c0_34, %c0_35] : memref<4x20x16xf32, #tpu.memory_space<vmem>>, vector<4x20x16xf32>
    %c0_36 = arith.constant 0 : index
    %c0_37 = arith.constant 0 : index
    %c3 = arith.constant 3 : index
    %21 = vector.load %arg3[%c0_36, %c0_37, %c3] : memref<4x20x20xf32, #tpu.memory_space<vmem>>, vector<4x20x16xf32>
    %cst_38 = arith.constant 0.945959448 : f32
    %22 = vector.broadcast %cst_38 : f32 to vector<4x20x16xf32>
    %23 = arith.mulf %22, %21 : vector<4x20x16xf32>
    %24 = arith.addf %20, %23 : vector<4x20x16xf32>
    %c0_39 = arith.constant 0 : index
    %c0_40 = arith.constant 0 : index
    %c0_41 = arith.constant 0 : index
    %25 = vector.load %arg4[%c0_39, %c0_40, %c0_41] : memref<4x20x16xf32, #tpu.memory_space<vmem>>, vector<4x20x16xf32>
    tpu.vector_store %arg4[%c0_39, %c0_40, %c0_41], %24 {strides = array<i32>} : memref<4x20x16xf32, #tpu.memory_space<vmem>>, vector<4x20x16xf32>,
    %c0_42 = arith.constant 0 : index
    %c0_43 = arith.constant 0 : index
    %c0_44 = arith.constant 0 : index
    %26 = vector.load %arg4[%c0_42, %c0_43, %c0_44] : memref<4x20x16xf32, #tpu.memory_space<vmem>>, vector<4x20x16xf32>
    %c0_45 = arith.constant 0 : index
    %c0_46 = arith.constant 0 : index
    %c4 = arith.constant 4 : index
    %27 = vector.load %arg3[%c0_45, %c0_46, %c4] : memref<4x20x20xf32, #tpu.memory_space<vmem>>, vector<4x20x16xf32>
    %cst_47 = arith.constant 0.800737381 : f32
    %28 = vector.broadcast %cst_47 : f32 to vector<4x20x16xf32>
    %29 = arith.mulf %28, %27 : vector<4x20x16xf32>
    %30 = arith.addf %26, %29 : vector<4x20x16xf32>
    %c0_48 = arith.constant 0 : index
    %c0_49 = arith.constant 0 : index
    %c0_50 = arith.constant 0 : index
    %31 = vector.load %arg4[%c0_48, %c0_49, %c0_50] : memref<4x20x16xf32, #tpu.memory_space<vmem>>, vector<4x20x16xf32>
    tpu.vector_store %arg4[%c0_48, %c0_49, %c0_50], %30 {strides = array<i32>} : memref<4x20x16xf32, #tpu.memory_space<vmem>>, vector<4x20x16xf32>,
    %c0_51 = arith.constant 0 : index
    %c0_52 = arith.constant 0 : index
    %c0_53 = arith.constant 0 : index
    %32 = vector.load %arg4[%c0_51, %c0_52, %c0_53] : memref<4x20x16xf32, #tpu.memory_space<vmem>>, vector<4x16x16xf32>
    %cst_54 = arith.constant 0.800737381 : f32
    %33 = vector.broadcast %cst_54 : f32 to vector<4x16x16xf32>
    %34 = arith.mulf %33, %32 : vector<4x16x16xf32>
    %c0_55 = arith.constant 0 : index
    %c0_56 = arith.constant 0 : index
    %c0_57 = arith.constant 0 : index
    %35 = vector.load %arg5[%c0_55, %c0_56, %c0_57] : memref<4x16x16xf32, #tpu.memory_space<vmem>>, vector<4x16x16xf32>
    tpu.vector_store %arg5[%c0_55, %c0_56, %c0_57], %34 {strides = array<i32>} : memref<4x16x16xf32, #tpu.memory_space<vmem>>, vector<4x16x16xf32>,
    %c0_58 = arith.constant 0 : index
    %c0_59 = arith.constant 0 : index
    %c0_60 = arith.constant 0 : index
    %36 = vector.load %arg5[%c0_58, %c0_59, %c0_60] : memref<4x16x16xf32, #tpu.memory_space<vmem>>, vector<4x16x16xf32>
    %c0_61 = arith.constant 0 : index
    %c1_62 = arith.constant 1 : index
    %c0_63 = arith.constant 0 : index
    %37 = vector.load %arg4[%c0_61, %c1_62, %c0_63] : memref<4x20x16xf32, #tpu.memory_space<vmem>>, vector<4x16x16xf32>
    %cst_64 = arith.constant 0.945959448 : f32
    %38 = vector.broadcast %cst_64 : f32 to vector<4x16x16xf32>
    %39 = arith.mulf %38, %37 : vector<4x16x16xf32>
    %40 = arith.addf %36, %39 : vector<4x16x16xf32>
    %c0_65 = arith.constant 0 : index
    %c0_66 = arith.constant 0 : index
    %c0_67 = arith.constant 0 : index
    %41 = vector.load %arg5[%c0_65, %c0_66, %c0_67] : memref<4x16x16xf32, #tpu.memory_space<vmem>>, vector<4x16x16xf32>
    tpu.vector_store %arg5[%c0_65, %c0_66, %c0_67], %40 {strides = array<i32>} : memref<4x16x16xf32, #tpu.memory_space<vmem>>, vector<4x16x16xf32>,
    %c0_68 = arith.constant 0 : index
    %c0_69 = arith.constant 0 : index
    %c0_70 = arith.constant 0 : index
    %42 = vector.load %arg5[%c0_68, %c0_69, %c0_70] : memref<4x16x16xf32, #tpu.memory_space<vmem>>, vector<4x16x16xf32>
    %c0_71 = arith.constant 0 : index
    %c2_72 = arith.constant 2 : index
    %c0_73 = arith.constant 0 : index
    %43 = vector.load %arg4[%c0_71, %c2_72, %c0_73] : memref<4x20x16xf32, #tpu.memory_space<vmem>>, vector<4x16x16xf32>
    %cst_74 = arith.constant 1.000000e+00 : f32
    %44 = vector.broadcast %cst_74 : f32 to vector<4x16x16xf32>
    %45 = arith.mulf %44, %43 : vector<4x16x16xf32>
    %46 = arith.addf %42, %45 : vector<4x16x16xf32>
    %c0_75 = arith.constant 0 : index
    %c0_76 = arith.constant 0 : index
    %c0_77 = arith.constant 0 : index
    %47 = vector.load %arg5[%c0_75, %c0_76, %c0_77] : memref<4x16x16xf32, #tpu.memory_space<vmem>>, vector<4x16x16xf32>
    tpu.vector_store %arg5[%c0_75, %c0_76, %c0_77], %46 {strides = array<i32>} : memref<4x16x16xf32, #tpu.memory_space<vmem>>, vector<4x16x16xf32>,
    %c0_78 = arith.constant 0 : index
    %c0_79 = arith.constant 0 : index
    %c0_80 = arith.constant 0 : index
    %48 = vector.load %arg5[%c0_78, %c0_79, %c0_80] : memref<4x16x16xf32, #tpu.memory_space<vmem>>, vector<4x16x16xf32>
    %c0_81 = arith.constant 0 : index
    %c3_82 = arith.constant 3 : index
    %c0_83 = arith.constant 0 : index
    %49 = vector.load %arg4[%c0_81, %c3_82, %c0_83] : memref<4x20x16xf32, #tpu.memory_space<vmem>>, vector<4x16x16xf32>
    %cst_84 = arith.constant 0.945959448 : f32
    %50 = vector.broadcast %cst_84 : f32 to vector<4x16x16xf32>
    %51 = arith.mulf %50, %49 : vector<4x16x16xf32>
    %52 = arith.addf %48, %51 : vector<4x16x16xf32>
    %c0_85 = arith.constant 0 : index
    %c0_86 = arith.constant 0 : index
    %c0_87 = arith.constant 0 : index
    %53 = vector.load %arg5[%c0_85, %c0_86, %c0_87] : memref<4x16x16xf32, #tpu.memory_space<vmem>>, vector<4x16x16xf32>
    tpu.vector_store %arg5[%c0_85, %c0_86, %c0_87], %52 {strides = array<i32>} : memref<4x16x16xf32, #tpu.memory_space<vmem>>, vector<4x16x16xf32>,
    %c0_88 = arith.constant 0 : index
    %c0_89 = arith.constant 0 : index
    %c0_90 = arith.constant 0 : index
    %54 = vector.load %arg5[%c0_88, %c0_89, %c0_90] : memref<4x16x16xf32, #tpu.memory_space<vmem>>, vector<4x16x16xf32>
    %c0_91 = arith.constant 0 : index
    %c4_92 = arith.constant 4 : index
    %c0_93 = arith.constant 0 : index
    %55 = vector.load %arg4[%c0_91, %c4_92, %c0_93] : memref<4x20x16xf32, #tpu.memory_space<vmem>>, vector<4x16x16xf32>
    %cst_94 = arith.constant 0.800737381 : f32
    %56 = vector.broadcast %cst_94 : f32 to vector<4x16x16xf32>
    %57 = arith.mulf %56, %55 : vector<4x16x16xf32>
    %58 = arith.addf %54, %57 : vector<4x16x16xf32>
    %c0_95 = arith.constant 0 : index
    %c0_96 = arith.constant 0 : index
    %c0_97 = arith.constant 0 : index
    %59 = vector.load %arg5[%c0_95, %c0_96, %c0_97] : memref<4x16x16xf32, #tpu.memory_space<vmem>>, vector<4x16x16xf32>
    tpu.vector_store %arg5[%c0_95, %c0_96, %c0_97], %58 {strides = array<i32>} : memref<4x16x16xf32, #tpu.memory_space<vmem>>, vector<4x16x16xf32>,
    %c0_98 = arith.constant 0 : index
    %c0_99 = arith.constant 0 : index
    %c0_100 = arith.constant 0 : index
    %60 = vector.load %arg5[%c0_98, %c0_99, %c0_100] : memref<4x16x16xf32, #tpu.memory_space<vmem>>, vector<4x16x16xf32>
    %c0_101 = arith.constant 0 : index
    %c0_102 = arith.constant 0 : index
    %c0_103 = arith.constant 0 : index
    %61 = vector.load %arg2[%c0_101, %c0_102, %c0_103] : memref<4x16x16xf32, #tpu.memory_space<vmem>>, vector<4x16x16xf32>
    tpu.vector_store %arg2[%c0_101, %c0_102, %c0_103], %60 {strides = array<i32>} : memref<4x16x16xf32, #tpu.memory_space<vmem>>, vector<4x16x16xf32>,
    return
  }
  func.func @transform_0(%arg0: i32) -> (i32, i32, i32) {
    %c0_i32 = arith.constant 0 : i32
    %c0_i32_0 = arith.constant 0 : i32
    %c0_i32_1 = arith.constant 0 : i32
    return %arg0, %c0_i32, %c0_i32_0 : i32, i32, i32
  }
  func.func @transform_1(%arg0: i32) -> (i32, i32, i32) {
    %c0_i32 = arith.constant 0 : i32
    %c0_i32_0 = arith.constant 0 : i32
    %c0_i32_1 = arith.constant 0 : i32
    return %arg0, %c0_i32, %c0_i32_0 : i32, i32, i32
  }
}

</mosaic_0001>

<llo_original>
// kernel: tpu_custom_call.1
$region0: #{tpu_custom_call.1}
  #allocation0 [shape = 'u32[]', space=smem, size = 0x4, offset = 0x4, fixed_abs, tag = 'smem constant byte address 0x4 - core index']
  #allocation1 [shape = 'u32[144,128]{1,0:T(1,128)}', space=vmem, size = 0x12000, scoped, tag = 'internal scratch']
  #allocation2 [shape = 'f32[4,20,20]{2,1,0:T(8,128)}', space=vmem, size = 0xc000, scoped, tag = 'scratch operand']
  #allocation3 [shape = 'f32[4,20,16]{2,1,0:T(8,128)}', space=vmem, size = 0xc000, scoped, tag = 'scratch operand']
  #allocation4 [shape = 'f32[4,16,16]{2,1,0:T(8,128)}', space=vmem, size = 0x8000, scoped, tag = 'scratch operand']
  %s0 = inlined_call_operand.hbm [shape: f32[8,16,16], index: 0, kind: input, shape index: {}]
  %s1 = inlined_call_operand.hbm [shape: f32[8,16,16], index: 1, kind: output, shape index: {}]
  %s2 = sld [smem:[#allocation0]]
  $region41: #{tpu_custom_call.1} parent=0
    _
  %s4 = ssub.s32 1, %s2
  %s5 = scalar_select 0, %s4, %s2
  $region1: #{tpu_custom_call.1} parent=0
    #allocation5 [shape = 'u8[65536]{0}', space=vmem, size = 0x10000, scoped, tag = 'input window, operand 0']
    #allocation6 [shape = 's32[2]{0}', space=sflag, size = 0x8, scoped, tag = 'scoped memory for tpu_custom_call.1']
    #allocation7 [shape = 's32[2]{0}', space=sflag, size = 0x8, scoped, tag = 'scoped memory for tpu_custom_call.1']
    #allocation8 [shape = 'u8[65536]{0}', space=vmem, size = 0x10000, scoped, tag = 'output window, operand 0']
    %6 = vsyncpa [#allocation6], 0
    %s7 = scalar_lea.sflag [#allocation6], 1
    %8 = vsyncpa %s7, 0
    %9 = vsyncpa [#allocation7], 0
    %s10 = scalar_lea.sflag [#allocation7], 1
    %11 = vsyncpa %s10, 0
    loop: start=0, step=1, limit=4
    $region2: #{tpu_custom_call.1} parent=1 // loop_pre_header
      _
    $region3: #{tpu_custom_call.1} parent=1 // loop_header
      %s13 = sphi 0, %s17
      %p14 = scmp.ge.s32.totalorder %s13, 4
      %s23 = sphi 0, %s25
      %s26 = sphi 0, %s23
      %s27 = sphi 0, %s26
      %s43 = sphi 0, %s27
      %s49 = sphi 0, %s51
      %s52 = sphi 0, %s49
      %s53 = sphi 0, %s52
      %s69 = sphi 0, %s53
    $region4: #{tpu_custom_call.1} parent=1 // loop_header_branch
      %16 = sbr.rel (%p14) target = $region8
    $region5: #{tpu_custom_call.1} parent=1 // loop_body
      %s18 = ssub.s32 %s13, 1
      %s19 = ssub.s32 %s13, 2
      %s20 = sadd.s32 %s13, 1
      %s21 = ssub.s32 %s13, %s20
      %p22 = scmp.eq.s32.totalorder %s21, 0
      %s24 = sadd.s32 %s23, 1
      %s25 = scalar_select %p22, %s23, %s24
      %p28 = pneg %p22
      %p29 = scmp.eq.s32.totalorder %s13, 1
      %p30 = por %p28, %p29
      %p31 = scmp.ne.s32.totalorder %s23, %s26
      %p32 = scmp.eq.s32.totalorder %s13, 0
      %p33 = por %p31, %p32
      %p34 = scmp.ne.s32.totalorder %s23, %s26
      %p35 = scmp.eq.s32.totalorder %s18, 1
      %p36 = por %p34, %p35
      %p37 = scmp.ne.s32.totalorder %s26, %s27
      %p38 = scmp.eq.s32.totalorder %s18, 0
      %p39 = por %p37, %p38
      %p40 = scmp.ne.s32.totalorder %s26, %s27
      %p41 = scmp.eq.s32.totalorder %s19, 1
      %p42 = por %p40, %p41
      %p44 = scmp.ne.s32.totalorder %s27, %s43
      %p45 = scmp.eq.s32.totalorder %s19, 0
      %p46 = por %p44, %p45
      %s47 = ssub.s32 %s13, %s20
      %p48 = scmp.eq.s32.totalorder %s47, 0
      %s50 = sadd.s32 %s49, 1
      %s51 = scalar_select %p48, %s49, %s50
      %p54 = pneg %p48
      %p55 = scmp.eq.s32.totalorder %s13, 1
      %p56 = por %p54, %p55
      %p57 = scmp.ne.s32.totalorder %s49, %s52
      %p58 = scmp.eq.s32.totalorder %s13, 0
      %p59 = por %p57, %p58
      %p60 = scmp.ne.s32.totalorder %s49, %s52
      %p61 = scmp.eq.s32.totalorder %s18, 1
      %p62 = por %p60, %p61
      %p63 = scmp.ne.s32.totalorder %s52, %s53
      %p64 = scmp.eq.s32.totalorder %s18, 0
      %p65 = por %p63, %p64
      %p66 = scmp.ne.s32.totalorder %s52, %s53
      %p67 = scmp.eq.s32.totalorder %s19, 1
      %p68 = por %p66, %p67
      %p70 = scmp.ne.s32.totalorder %s53, %s69
      %p71 = scmp.eq.s32.totalorder %s19, 0
      %p72 = por %p70, %p71
      %p73 = scmp.le.s32.totalorder 1, %s13
      %p74 = scmp.lt.s32.totalorder %s13, 3
      %p75 = pnand %p73, %p74
      %p76 = pneg %p75
      // Predicated region
      $region9: #{tpu_custom_call.1} parent=5 // pred_check
        _
      $region10: #{tpu_custom_call.1} parent=5 // pred_check_branch
        %78 = sbr.rel (%p75) target = $region12
      $region11: #{tpu_custom_call.1} parent=5 // pred_region
        %s79 = ssub.s32 %s13, 1
      $region12: #{tpu_custom_call.1} parent=5 // pred_fallthru
        _
      %p80 = scmp.lt.s32.totalorder %s13, 2
      // Predicated region
      $region13: #{tpu_custom_call.1} parent=5 // pred_check
        %p81 = pneg %p80
      $region14: #{tpu_custom_call.1} parent=5 // pred_check_branch
        %83 = sbr.rel (%p81) target = $region16
      $region15: #{tpu_custom_call.1} parent=5 // pred_region
        // Predicated region
        $region17: #{tpu_custom_call.1} parent=15 // pred_check
          %p84 = pneg %p33
        $region18: #{tpu_custom_call.1} parent=15 // pred_check_branch
          %86 = sbr.rel (%p84) target = $region20
        $region19: #{tpu_custom_call.1} parent=15 // pred_region
          %s87 = sand.u32 %s23, 1
          %s88 = scalar_lea.sflag [#allocation6], %s87
          %s89 = sand.u32 %s23, 1
          %s90 = smul.addr %s89, 64
          %s91 = scalar_lea.vmem [#allocation5], %s90
          %s92 = smul.u32 4, %s13
          %s94 = ssub.s32 1024, 1024
          %95 = vsyncadd %s88, %s94
          %s96 = smul.addr %s92, 2
          %s97 = smul.addr %s96, 128
          %s98 = scalar_lea.hbm %s0, %s97
          %s99 = sshll.u32 %s91, 4
          %s100 = int_to_ptr.vmem [resolvable:$true] %s99
          %105 = dma.hbm_to_vmem [thread:$0]  %s98, 1024, %s100, %s88, 128, 128, 8
        $region20: #{tpu_custom_call.1} parent=15 // pred_fallthru
          _
      $region16: #{tpu_custom_call.1} parent=5 // pred_fallthru
        _
      %p106 = scmp.le.s32.totalorder 1, %s13
      %p107 = scmp.lt.s32.totalorder %s13, 3
      %p108 = pnand %p106, %p107
      %p109 = pneg %p108
      // Predicated region
      $region21: #{tpu_custom_call.1} parent=5 // pred_check
        _
      $region22: #{tpu_custom_call.1} parent=5 // pred_check_branch
        %111 = sbr.rel (%p108) target = $region24
      $region23: #{tpu_custom_call.1} parent=5 // pred_region
        %s112 = ssub.s32 %s13, 1
        %s113 = sand.u32 %s26, 1
        %s114 = scalar_lea.sflag [#allocation6], %s113
        %s115 = sand.u32 %s26, 1
        %s116 = smul.addr %s115, 64
        %s117 = scalar_lea.vmem [#allocation5], %s116
        // Predicated region
        $region25: #{tpu_custom_call.1} parent=23 // pred_check
          %p118 = pneg %p39
        $region26: #{tpu_custom_call.1} parent=23 // pred_check_branch
          %120 = sbr.rel (%p118) target = $region28
        $region27: #{tpu_custom_call.1} parent=23 // pred_region
          %121 = dma.done %s114, 1024
        $region28: #{tpu_custom_call.1} parent=23 // pred_fallthru
          _
        %s122 = sand.u32 %s26, 1
        %s123 = scalar_lea.sflag [#allocation6], %s122
        %s124 = sand.u32 %s26, 1
        %s125 = smul.addr %s124, 64
        %s126 = scalar_lea.vmem [#allocation5], %s125
        %p127 = pneg %p39
        %p128 = pneg %p36
        %p129 = pneg %p65
        %p130 = pneg %p62
        %s131 = sand.u32 %s52, 1
        %s132 = scalar_lea.sflag [#allocation7], %s131
        %s133 = sand.u32 %s52, 1
        %s134 = smul.addr %s133, 64
        %s135 = scalar_lea.vmem [#allocation8], %s134
        %s136 = smul.u32 4, %s18
        %s137 = smul.u32 4, %s18
        %vm138 = vcmask 162816
        %139 = vst.msk [vmem:[#allocation2] sm:$0xff] %vm138, 0.0
        %140 = vst.msk [vmem:[#allocation2 + $0x8] sm:$0xff] %vm138, 0.0
        %vm141 = vcmask 158720
        %142 = vst.msk [vmem:[#allocation2 + $0x10] sm:$0xf] %vm141, 0.0
        %143 = vst.msk [vmem:[#allocation2 + $0x18] sm:$0xff] %vm138, 0.0
        %144 = vst.msk [vmem:[#allocation2 + $0x20] sm:$0xff] %vm138, 0.0
        %145 = vst.msk [vmem:[#allocation2 + $0x28] sm:$0xf] %vm141, 0.0
        %146 = vst.msk [vmem:[#allocation2 + $0x30] sm:$0xff] %vm138, 0.0
        %147 = vst.msk [vmem:[#allocation2 + $0x38] sm:$0xff] %vm138, 0.0
        %148 = vst.msk [vmem:[#allocation2 + $0x40] sm:$0xf] %vm141, 0.0
        %149 = vst.msk [vmem:[#allocation2 + $0x48] sm:$0xff] %vm138, 0.0
        %150 = vst.msk [vmem:[#allocation2 + $0x50] sm:$0xff] %vm138, 0.0
        %151 = vst.msk [vmem:[#allocation2 + $0x58] sm:$0xf] %vm141, 0.0
        %v152 = vld [vmem:[%s117] sm:$0xff]
        %v153 = vld [vmem:[%s117 + $0x8] sm:$0xff]
        %v154 = vld [vmem:[%s117 + $0x10] sm:$0xff]
        %v155 = vld [vmem:[%s117 + $0x18] sm:$0xff]
        %v156 = vld [vmem:[%s117 + $0x20] sm:$0xff]
        %v157 = vld [vmem:[%s117 + $0x28] sm:$0xff]
        %v158 = vld [vmem:[%s117 + $0x30] sm:$0xff]
        %v159 = vld [vmem:[%s117 + $0x38] sm:$0xff]
        %168 = vrot.lane.b32.xlu0 %v152, 2
        %v169 = vpop.permute.xlu0 %168
        %170 = vrot.lane.b32.xlu0 %v153, 2
        %v171 = vpop.permute.xlu0 %170
        %172 = vrot.lane.b32.xlu0 %v154, 2
        %v173 = vpop.permute.xlu0 %172
        %174 = vrot.lane.b32.xlu0 %v155, 2
        %v175 = vpop.permute.xlu0 %174
        %176 = vrot.lane.b32.xlu0 %v156, 2
        %v177 = vpop.permute.xlu0 %176
        %178 = vrot.lane.b32.xlu0 %v157, 2
        %v179 = vpop.permute.xlu0 %178
        %180 = vrot.lane.b32.xlu0 %v158, 2
        %v181 = vpop.permute.xlu0 %180
        %182 = vrot.lane.b32.xlu0 %v159, 2
        %v183 = vpop.permute.xlu0 %182
        %vm192 = vcmask 146448
        %193 = vst.msk [vmem:[#allocation2 + $0x2] sm:$0xff] %vm192, %v169
        %194 = vst.msk [vmem:[#allocation2 + $0xa] sm:$0xff] %vm192, %v171
        %195 = vst.msk [vmem:[#allocation2 + $0x1a] sm:$0xff] %vm192, %v173
        %196 = vst.msk [vmem:[#allocation2 + $0x22] sm:$0xff] %vm192, %v175
        %197 = vst.msk [vmem:[#allocation2 + $0x32] sm:$0xff] %vm192, %v177
        %198 = vst.msk [vmem:[#allocation2 + $0x3a] sm:$0xff] %vm192, %v179
        %199 = vst.msk [vmem:[#allocation2 + $0x4a] sm:$0xff] %vm192, %v181
        %200 = vst.msk [vmem:[#allocation2 + $0x52] sm:$0xff] %vm192, %v183
        %v201 = vld [vmem:[#allocation2] sm:$0xff]
        %v202 = vld [vmem:[#allocation2 + $0x8] sm:$0xff]
        %v203 = vld [vmem:[#allocation2 + $0x10] sm:$0xf]
        %v204 = vld [vmem:[#allocation2 + $0x18] sm:$0xff]
        %v205 = vld [vmem:[#allocation2 + $0x20] sm:$0xff]
        %v206 = vld [vmem:[#allocation2 + $0x28] sm:$0xf]
        %v207 = vld [vmem:[#allocation2 + $0x30] sm:$0xff]
        %v208 = vld [vmem:[#allocation2 + $0x38] sm:$0xff]
        %v209 = vld [vmem:[#allocation2 + $0x40] sm:$0xf]
        %v210 = vld [vmem:[#allocation2 + $0x48] sm:$0xff]
        %v211 = vld [vmem:[#allocation2 + $0x50] sm:$0xff]
        %v212 = vld [vmem:[#allocation2 + $0x58] sm:$0xf]
        %v213 = vmul.f32 %v201, 0.8007374
        %v214 = vmul.f32 %v202, 0.8007374
        %v215 = vmul.f32 %v203, 0.8007374
        %v216 = vmul.f32 %v204, 0.8007374
        %v217 = vmul.f32 %v205, 0.8007374
        %v218 = vmul.f32 %v206, 0.8007374
        %v219 = vmul.f32 %v207, 0.8007374
        %v220 = vmul.f32 %v208, 0.8007374
        %v221 = vmul.f32 %v209, 0.8007374
        %v222 = vmul.f32 %v210, 0.8007374
        %v223 = vmul.f32 %v211, 0.8007374
        %v224 = vmul.f32 %v212, 0.8007374
        %vm225 = vcmask 130048
        %226 = vst.msk [vmem:[#allocation3] sm:$0xff] %vm225, %v213
        %227 = vst.msk [vmem:[#allocation3 + $0x8] sm:$0xff] %vm225, %v214
        %vm228 = vcmask 125952
        %229 = vst.msk [vmem:[#allocation3 + $0x10] sm:$0xf] %vm228, %v215
        %230 = vst.msk [vmem:[#allocation3 + $0x18] sm:$0xff] %vm225, %v216
        %231 = vst.msk [vmem:[#allocation3 + $0x20] sm:$0xff] %vm225, %v217
        %232 = vst.msk [vmem:[#allocation3 + $0x28] sm:$0xf] %vm228, %v218
        %233 = vst.msk [vmem:[#allocation3 + $0x30] sm:$0xff] %vm225, %v219
        %234 = vst.msk [vmem:[#allocation3 + $0x38] sm:$0xff] %vm225, %v220
        %235 = vst.msk [vmem:[#allocation3 + $0x40] sm:$0xf] %vm228, %v221
        %236 = vst.msk [vmem:[#allocation3 + $0x48] sm:$0xff] %vm225, %v222
        %237 = vst.msk [vmem:[#allocation3 + $0x50] sm:$0xff] %vm225, %v223
        %238 = vst.msk [vmem:[#allocation3 + $0x58] sm:$0xf] %vm228, %v224
        %v239 = vld [vmem:[#allocation3] sm:$0xff]
        %v240 = vld [vmem:[#allocation3 + $0x8] sm:$0xff]
        %v241 = vld [vmem:[#allocation3 + $0x10] sm:$0xf]
        %v242 = vld [vmem:[#allocation3 + $0x18] sm:$0xff]
        %v243 = vld [vmem:[#allocation3 + $0x20] sm:$0xff]
        %v244 = vld [vmem:[#allocation3 + $0x28] sm:$0xf]
        %v245 = vld [vmem:[#allocation3 + $0x30] sm:$0xff]
        %v246 = vld [vmem:[#allocation3 + $0x38] sm:$0xff]
        %v247 = vld [vmem:[#allocation3 + $0x40] sm:$0xf]
        %v248 = vld [vmem:[#allocation3 + $0x48] sm:$0xff]
        %v249 = vld [vmem:[#allocation3 + $0x50] sm:$0xff]
        %v250 = vld [vmem:[#allocation3 + $0x58] sm:$0xf]
        %v251 = vld [vmem:[#allocation2] sm:$0xff]
        %v252 = vld [vmem:[#allocation2 + $0x8] sm:$0xff]
        %v253 = vld [vmem:[#allocation2 + $0x10] sm:$0xf]
        %v254 = vld [vmem:[#allocation2 + $0x18] sm:$0xff]
        %v255 = vld [vmem:[#allocation2 + $0x20] sm:$0xff]
        %v256 = vld [vmem:[#allocation2 + $0x28] sm:$0xf]
        %v257 = vld [vmem:[#allocation2 + $0x30] sm:$0xff]
        %v258 = vld [vmem:[#allocation2 + $0x38] sm:$0xff]
        %v259 = vld [vmem:[#allocation2 + $0x40] sm:$0xf]
        %v260 = vld [vmem:[#allocation2 + $0x48] sm:$0xff]
        %v261 = vld [vmem:[#allocation2 + $0x50] sm:$0xff]
        %v262 = vld [vmem:[#allocation2 + $0x58] sm:$0xf]
        %v263 = vmul.f32 %v251, 0.94595945
        %v264 = vmul.f32 %v252, 0.94595945
        %v265 = vmul.f32 %v253, 0.94595945
        %v266 = vmul.f32 %v254, 0.94595945
        %v267 = vmul.f32 %v255, 0.94595945
        %v268 = vmul.f32 %v256, 0.94595945
        %v269 = vmul.f32 %v257, 0.94595945
        %v270 = vmul.f32 %v258, 0.94595945
        %v271 = vmul.f32 %v259, 0.94595945
        %v272 = vmul.f32 %v260, 0.94595945
        %v273 = vmul.f32 %v261, 0.94595945
        %v274 = vmul.f32 %v262, 0.94595945
        %287 = vrot.lane.b32.xlu0 %v263, 127
        %v288 = vpop.permute.xlu0 %287
        %289 = vrot.lane.b32.xlu0 %v264, 127
        %v290 = vpop.permute.xlu0 %289
        %291 = vrot.lane.b32.xlu0 %v265, 127
        %v292 = vpop.permute.xlu0 %291
        %293 = vrot.lane.b32.xlu0 %v266, 127
        %v294 = vpop.permute.xlu0 %293
        %295 = vrot.lane.b32.xlu0 %v267, 127
        %v296 = vpop.permute.xlu0 %295
        %297 = vrot.lane.b32.xlu0 %v268, 127
        %v298 = vpop.permute.xlu0 %297
        %299 = vrot.lane.b32.xlu0 %v269, 127
        %v300 = vpop.permute.xlu0 %299
        %301 = vrot.lane.b32.xlu0 %v270, 127
        %v302 = vpop.permute.xlu0 %301
        %303 = vrot.lane.b32.xlu0 %v271, 127
        %v304 = vpop.permute.xlu0 %303
        %305 = vrot.lane.b32.xlu0 %v272, 127
        %v306 = vpop.permute.xlu0 %305
        %307 = vrot.lane.b32.xlu0 %v273, 127
        %v308 = vpop.permute.xlu0 %307
        %309 = vrot.lane.b32.xlu0 %v274, 127
        %v310 = vpop.permute.xlu0 %309
        %v323 = vadd.f32 %v239, %v288
        %v324 = vadd.f32 %v240, %v290
        %v325 = vadd.f32 %v241, %v292
        %v326 = vadd.f32 %v242, %v294
        %v327 = vadd.f32 %v243, %v296
        %v328 = vadd.f32 %v244, %v298
        %v329 = vadd.f32 %v245, %v300
        %v330 = vadd.f32 %v246, %v302
        %v331 = vadd.f32 %v247, %v304
        %v332 = vadd.f32 %v248, %v306
        %v333 = vadd.f32 %v249, %v308
        %v334 = vadd.f32 %v250, %v310
        %335 = vst.msk [vmem:[#allocation3] sm:$0xff] %vm225, %v323
        %336 = vst.msk [vmem:[#allocation3 + $0x8] sm:$0xff] %vm225, %v324
        %337 = vst.msk [vmem:[#allocation3 + $0x10] sm:$0xf] %vm228, %v325
        %338 = vst.msk [vmem:[#allocation3 + $0x18] sm:$0xff] %vm225, %v326
        %339 = vst.msk [vmem:[#allocation3 + $0x20] sm:$0xff] %vm225, %v327
        %340 = vst.msk [vmem:[#allocation3 + $0x28] sm:$0xf] %vm228, %v328
        %341 = vst.msk [vmem:[#allocation3 + $0x30] sm:$0xff] %vm225, %v329
        %342 = vst.msk [vmem:[#allocation3 + $0x38] sm:$0xff] %vm225, %v330
        %343 = vst.msk [vmem:[#allocation3 + $0x40] sm:$0xf] %vm228, %v331
        %344 = vst.msk [vmem:[#allocation3 + $0x48] sm:$0xff] %vm225, %v332
        %345 = vst.msk [vmem:[#allocation3 + $0x50] sm:$0xff] %vm225, %v333
        %346 = vst.msk [vmem:[#allocation3 + $0x58] sm:$0xf] %vm228, %v334
        %v347 = vld [vmem:[#allocation3] sm:$0xff]
        %v348 = vld [vmem:[#allocation3 + $0x8] sm:$0xff]
        %v349 = vld [vmem:[#allocation3 + $0x10] sm:$0xf]
        %v350 = vld [vmem:[#allocation3 + $0x18] sm:$0xff]
        %v351 = vld [vmem:[#allocation3 + $0x20] sm:$0xff]
        %v352 = vld [vmem:[#allocation3 + $0x28] sm:$0xf]
        %v353 = vld [vmem:[#allocation3 + $0x30] sm:$0xff]
        %v354 = vld [vmem:[#allocation3 + $0x38] sm:$0xff]
        %v355 = vld [vmem:[#allocation3 + $0x40] sm:$0xf]
        %v356 = vld [vmem:[#allocation3 + $0x48] sm:$0xff]
        %v357 = vld [vmem:[#allocation3 + $0x50] sm:$0xff]
        %v358 = vld [vmem:[#allocation3 + $0x58] sm:$0xf]
        %v359 = vld [vmem:[#allocation2] sm:$0xff]
        %v360 = vld [vmem:[#allocation2 + $0x8] sm:$0xff]
        %v361 = vld [vmem:[#allocation2 + $0x10] sm:$0xf]
        %v362 = vld [vmem:[#allocation2 + $0x18] sm:$0xff]
        %v363 = vld [vmem:[#allocation2 + $0x20] sm:$0xff]
        %v364 = vld [vmem:[#allocation2 + $0x28] sm:$0xf]
        %v365 = vld [vmem:[#allocation2 + $0x30] sm:$0xff]
        %v366 = vld [vmem:[#allocation2 + $0x38] sm:$0xff]
        %v367 = vld [vmem:[#allocation2 + $0x40] sm:$0xf]
        %v368 = vld [vmem:[#allocation2 + $0x48] sm:$0xff]
        %v369 = vld [vmem:[#allocation2 + $0x50] sm:$0xff]
        %v370 = vld [vmem:[#allocation2 + $0x58] sm:$0xf]
        %383 = vrot.lane.b32.xlu0 %v359, 126
        %v384 = vpop.permute.xlu0 %383
        %385 = vrot.lane.b32.xlu0 %v360, 126
        %v386 = vpop.permute.xlu0 %385
        %387 = vrot.lane.b32.xlu0 %v361, 126
        %v388 = vpop.permute.xlu0 %387
        %389 = vrot.lane.b32.xlu0 %v362, 126
        %v390 = vpop.permute.xlu0 %389
        %391 = vrot.lane.b32.xlu0 %v363, 126
        %v392 = vpop.permute.xlu0 %391
        %393 = vrot.lane.b32.xlu0 %v364, 126
        %v394 = vpop.permute.xlu0 %393
        %395 = vrot.lane.b32.xlu0 %v365, 126
        %v396 = vpop.permute.xlu0 %395
        %397 = vrot.lane.b32.xlu0 %v366, 126
        %v398 = vpop.permute.xlu0 %397
        %399 = vrot.lane.b32.xlu0 %v367, 126
        %v400 = vpop.permute.xlu0 %399
        %401 = vrot.lane.b32.xlu0 %v368, 126
        %v402 = vpop.permute.xlu0 %401
        %403 = vrot.lane.b32.xlu0 %v369, 126
        %v404 = vpop.permute.xlu0 %403
        %405 = vrot.lane.b32.xlu0 %v370, 126
        %v406 = vpop.permute.xlu0 %405
        %v419 = vadd.f32 %v347, %v384
        %v420 = vadd.f32 %v348, %v386
        %v421 = vadd.f32 %v349, %v388
        %v422 = vadd.f32 %v350, %v390
        %v423 = vadd.f32 %v351, %v392
        %v424 = vadd.f32 %v352, %v394
        %v425 = vadd.f32 %v353, %v396
        %v426 = vadd.f32 %v354, %v398
        %v427 = vadd.f32 %v355, %v400
        %v428 = vadd.f32 %v356, %v402
        %v429 = vadd.f32 %v357, %v404
        %v430 = vadd.f32 %v358, %v406
        %431 = vst.msk [vmem:[#allocation3] sm:$0xff] %vm225, %v419
        %432 = vst.msk [vmem:[#allocation3 + $0x8] sm:$0xff] %vm225, %v420
        %433 = vst.msk [vmem:[#allocation3 + $0x10] sm:$0xf] %vm228, %v421
        %434 = vst.msk [vmem:[#allocation3 + $0x18] sm:$0xff] %vm225, %v422
        %435 = vst.msk [vmem:[#allocation3 + $0x20] sm:$0xff] %vm225, %v423
        %436 = vst.msk [vmem:[#allocation3 + $0x28] sm:$0xf] %vm228, %v424
        %437 = vst.msk [vmem:[#allocation3 + $0x30] sm:$0xff] %vm225, %v425
        %438 = vst.msk [vmem:[#allocation3 + $0x38] sm:$0xff] %vm225, %v426
        %439 = vst.msk [vmem:[#allocation3 + $0x40] sm:$0xf] %vm228, %v427
        %440 = vst.msk [vmem:[#allocation3 + $0x48] sm:$0xff] %vm225, %v428
        %441 = vst.msk [vmem:[#allocation3 + $0x50] sm:$0xff] %vm225, %v429
        %442 = vst.msk [vmem:[#allocation3 + $0x58] sm:$0xf] %vm228, %v430
        %v443 = vld [vmem:[#allocation3] sm:$0xff]
        %v444 = vld [vmem:[#allocation3 + $0x8] sm:$0xff]
        %v445 = vld [vmem:[#allocation3 + $0x10] sm:$0xf]
        %v446 = vld [vmem:[#allocation3 + $0x18] sm:$0xff]
        %v447 = vld [vmem:[#allocation3 + $0x20] sm:$0xff]
        %v448 = vld [vmem:[#allocation3 + $0x28] sm:$0xf]
        %v449 = vld [vmem:[#allocation3 + $0x30] sm:$0xff]
        %v450 = vld [vmem:[#allocation3 + $0x38] sm:$0xff]
        %v451 = vld [vmem:[#allocation3 + $0x40] sm:$0xf]
        %v452 = vld [vmem:[#allocation3 + $0x48] sm:$0xff]
        %v453 = vld [vmem:[#allocation3 + $0x50] sm:$0xff]
        %v454 = vld [vmem:[#allocation3 + $0x58] sm:$0xf]
        %v455 = vld [vmem:[#allocation2] sm:$0xff]
        %v456 = vld [vmem:[#allocation2 + $0x8] sm:$0xff]
        %v457 = vld [vmem:[#allocation2 + $0x10] sm:$0xf]
        %v458 = vld [vmem:[#allocation2 + $0x18] sm:$0xff]
        %v459 = vld [vmem:[#allocation2 + $0x20] sm:$0xff]
        %v460 = vld [vmem:[#allocation2 + $0x28] sm:$0xf]
        %v461 = vld [vmem:[#allocation2 + $0x30] sm:$0xff]
        %v462 = vld [vmem:[#allocation2 + $0x38] sm:$0xff]
        %v463 = vld [vmem:[#allocation2 + $0x40] sm:$0xf]
        %v464 = vld [vmem:[#allocation2 + $0x48] sm:$0xff]
        %v465 = vld [vmem:[#allocation2 + $0x50] sm:$0xff]
        %v466 = vld [vmem:[#allocation2 + $0x58] sm:$0xf]
        %v467 = vmul.f32 %v455, 0.94595945
        %v468 = vmul.f32 %v456, 0.94595945
        %v469 = vmul.f32 %v457, 0.94595945
        %v470 = vmul.f32 %v458, 0.94595945
        %v471 = vmul.f32 %v459, 0.94595945
        %v472 = vmul.f32 %v460, 0.94595945
        %v473 = vmul.f32 %v461, 0.94595945
        %v474 = vmul.f32 %v462, 0.94595945
        %v475 = vmul.f32 %v463, 0.94595945
        %v476 = vmul.f32 %v464, 0.94595945
        %v477 = vmul.f32 %v465, 0.94595945
        %v478 = vmul.f32 %v466, 0.94595945
        %491 = vrot.lane.b32.xlu0 %v467, 125
        %v492 = vpop.permute.xlu0 %491
        %493 = vrot.lane.b32.xlu0 %v468, 125
        %v494 = vpop.permute.xlu0 %493
        %495 = vrot.lane.b32.xlu0 %v469, 125
        %v496 = vpop.permute.xlu0 %495
        %497 = vrot.lane.b32.xlu0 %v470, 125
        %v498 = vpop.permute.xlu0 %497
        %499 = vrot.lane.b32.xlu0 %v471, 125
        %v500 = vpop.permute.xlu0 %499
        %501 = vrot.lane.b32.xlu0 %v472, 125
        %v502 = vpop.permute.xlu0 %501
        %503 = vrot.lane.b32.xlu0 %v473, 125
        %v504 = vpop.permute.xlu0 %503
        %505 = vrot.lane.b32.xlu0 %v474, 125
        %v506 = vpop.permute.xlu0 %505
        %507 = vrot.lane.b32.xlu0 %v475, 125
        %v508 = vpop.permute.xlu0 %507
        %509 = vrot.lane.b32.xlu0 %v476, 125
        %v510 = vpop.permute.xlu0 %509
        %511 = vrot.lane.b32.xlu0 %v477, 125
        %v512 = vpop.permute.xlu0 %511
        %513 = vrot.lane.b32.xlu0 %v478, 125
        %v514 = vpop.permute.xlu0 %513
        %v527 = vadd.f32 %v443, %v492
        %v528 = vadd.f32 %v444, %v494
        %v529 = vadd.f32 %v445, %v496
        %v530 = vadd.f32 %v446, %v498
        %v531 = vadd.f32 %v447, %v500
        %v532 = vadd.f32 %v448, %v502
        %v533 = vadd.f32 %v449, %v504
        %v534 = vadd.f32 %v450, %v506
        %v535 = vadd.f32 %v451, %v508
        %v536 = vadd.f32 %v452, %v510
        %v537 = vadd.f32 %v453, %v512
        %v538 = vadd.f32 %v454, %v514
        %539 = vst.msk [vmem:[#allocation3] sm:$0xff] %vm225, %v527
        %540 = vst.msk [vmem:[#allocation3 + $0x8] sm:$0xff] %vm225, %v528
        %541 = vst.msk [vmem:[#allocation3 + $0x10] sm:$0xf] %vm228, %v529
        %542 = vst.msk [vmem:[#allocation3 + $0x18] sm:$0xff] %vm225, %v530
        %543 = vst.msk [vmem:[#allocation3 + $0x20] sm:$0xff] %vm225, %v531
        %544 = vst.msk [vmem:[#allocation3 + $0x28] sm:$0xf] %vm228, %v532
        %545 = vst.msk [vmem:[#allocation3 + $0x30] sm:$0xff] %vm225, %v533
        %546 = vst.msk [vmem:[#allocation3 + $0x38] sm:$0xff] %vm225, %v534
        %547 = vst.msk [vmem:[#allocation3 + $0x40] sm:$0xf] %vm228, %v535
        %548 = vst.msk [vmem:[#allocation3 + $0x48] sm:$0xff] %vm225, %v536
        %549 = vst.msk [vmem:[#allocation3 + $0x50] sm:$0xff] %vm225, %v537
        %550 = vst.msk [vmem:[#allocation3 + $0x58] sm:$0xf] %vm228, %v538
        %v551 = vld [vmem:[#allocation3] sm:$0xff]
        %v552 = vld [vmem:[#allocation3 + $0x8] sm:$0xff]
        %v553 = vld [vmem:[#allocation3 + $0x10] sm:$0xf]
        %v554 = vld [vmem:[#allocation3 + $0x18] sm:$0xff]
        %v555 = vld [vmem:[#allocation3 + $0x20] sm:$0xff]
        %v556 = vld [vmem:[#allocation3 + $0x28] sm:$0xf]
        %v557 = vld [vmem:[#allocation3 + $0x30] sm:$0xff]
        %v558 = vld [vmem:[#allocation3 + $0x38] sm:$0xff]
        %v559 = vld [vmem:[#allocation3 + $0x40] sm:$0xf]
        %v560 = vld [vmem:[#allocation3 + $0x48] sm:$0xff]
        %v561 = vld [vmem:[#allocation3 + $0x50] sm:$0xff]
        %v562 = vld [vmem:[#allocation3 + $0x58] sm:$0xf]
        %v563 = vld [vmem:[#allocation2] sm:$0xff]
        %v564 = vld [vmem:[#allocation2 + $0x8] sm:$0xff]
        %v565 = vld [vmem:[#allocation2 + $0x10] sm:$0xf]
        %v566 = vld [vmem:[#allocation2 + $0x18] sm:$0xff]
        %v567 = vld [vmem:[#allocation2 + $0x20] sm:$0xff]
        %v568 = vld [vmem:[#allocation2 + $0x28] sm:$0xf]
        %v569 = vld [vmem:[#allocation2 + $0x30] sm:$0xff]
        %v570 = vld [vmem:[#allocation2 + $0x38] sm:$0xff]
        %v571 = vld [vmem:[#allocation2 + $0x40] sm:$0xf]
        %v572 = vld [vmem:[#allocation2 + $0x48] sm:$0xff]
        %v573 = vld [vmem:[#allocation2 + $0x50] sm:$0xff]
        %v574 = vld [vmem:[#allocation2 + $0x58] sm:$0xf]
        %v575 = vmul.f32 %v563, 0.8007374
        %v576 = vmul.f32 %v564, 0.8007374
        %v577 = vmul.f32 %v565, 0.8007374
        %v578 = vmul.f32 %v566, 0.8007374
        %v579 = vmul.f32 %v567, 0.8007374
        %v580 = vmul.f32 %v568, 0.8007374
        %v581 = vmul.f32 %v569, 0.8007374
        %v582 = vmul.f32 %v570, 0.8007374
        %v583 = vmul.f32 %v571, 0.8007374
        %v584 = vmul.f32 %v572, 0.8007374
        %v585 = vmul.f32 %v573, 0.8007374
        %v586 = vmul.f32 %v574, 0.8007374
        %599 = vrot.lane.b32.xlu0 %v575, 124
        %v600 = vpop.permute.xlu0 %599
        %601 = vrot.lane.b32.xlu0 %v576, 124
        %v602 = vpop.permute.xlu0 %601
        %603 = vrot.lane.b32.xlu0 %v577, 124
        %v604 = vpop.permute.xlu0 %603
        %605 = vrot.lane.b32.xlu0 %v578, 124
        %v606 = vpop.permute.xlu0 %605
        %607 = vrot.lane.b32.xlu0 %v579, 124
        %v608 = vpop.permute.xlu0 %607
        %609 = vrot.lane.b32.xlu0 %v580, 124
        %v610 = vpop.permute.xlu0 %609
        %611 = vrot.lane.b32.xlu0 %v581, 124
        %v612 = vpop.permute.xlu0 %611
        %613 = vrot.lane.b32.xlu0 %v582, 124
        %v614 = vpop.permute.xlu0 %613
        %615 = vrot.lane.b32.xlu0 %v583, 124
        %v616 = vpop.permute.xlu0 %615
        %617 = vrot.lane.b32.xlu0 %v584, 124
        %v618 = vpop.permute.xlu0 %617
        %619 = vrot.lane.b32.xlu0 %v585, 124
        %v620 = vpop.permute.xlu0 %619
        %621 = vrot.lane.b32.xlu0 %v586, 124
        %v622 = vpop.permute.xlu0 %621
        %v635 = vadd.f32 %v551, %v600
        %v636 = vadd.f32 %v552, %v602
        %v637 = vadd.f32 %v553, %v604
        %v638 = vadd.f32 %v554, %v606
        %v639 = vadd.f32 %v555, %v608
        %v640 = vadd.f32 %v556, %v610
        %v641 = vadd.f32 %v557, %v612
        %v642 = vadd.f32 %v558, %v614
        %v643 = vadd.f32 %v559, %v616
        %v644 = vadd.f32 %v560, %v618
        %v645 = vadd.f32 %v561, %v620
        %v646 = vadd.f32 %v562, %v622
        %647 = vst.msk [vmem:[#allocation3] sm:$0xff] %vm225, %v635
        %648 = vst.msk [vmem:[#allocation3 + $0x8] sm:$0xff] %vm225, %v636
        %649 = vst.msk [vmem:[#allocation3 + $0x10] sm:$0xf] %vm228, %v637
        %650 = vst.msk [vmem:[#allocation3 + $0x18] sm:$0xff] %vm225, %v638
        %651 = vst.msk [vmem:[#allocation3 + $0x20] sm:$0xff] %vm225, %v639
        %652 = vst.msk [vmem:[#allocation3 + $0x28] sm:$0xf] %vm228, %v640
        %653 = vst.msk [vmem:[#allocation3 + $0x30] sm:$0xff] %vm225, %v641
        %654 = vst.msk [vmem:[#allocation3 + $0x38] sm:$0xff] %vm225, %v642
        %655 = vst.msk [vmem:[#allocation3 + $0x40] sm:$0xf] %vm228, %v643
        %656 = vst.msk [vmem:[#allocation3 + $0x48] sm:$0xff] %vm225, %v644
        %657 = vst.msk [vmem:[#allocation3 + $0x50] sm:$0xff] %vm225, %v645
        %658 = vst.msk [vmem:[#allocation3 + $0x58] sm:$0xf] %vm228, %v646
        %v659 = vld [vmem:[#allocation3] sm:$0xff]
        %v660 = vld [vmem:[#allocation3 + $0x8] sm:$0xff]
        %v661 = vld [vmem:[#allocation3 + $0x18] sm:$0xff]
        %v662 = vld [vmem:[#allocation3 + $0x20] sm:$0xff]
        %v663 = vld [vmem:[#allocation3 + $0x30] sm:$0xff]
        %v664 = vld [vmem:[#allocation3 + $0x38] sm:$0xff]
        %v665 = vld [vmem:[#allocation3 + $0x48] sm:$0xff]
        %v666 = vld [vmem:[#allocation3 + $0x50] sm:$0xff]
        %v667 = vmul.f32 %v659, 0.8007374
        %v668 = vmul.f32 %v660, 0.8007374
        %v669 = vmul.f32 %v661, 0.8007374
        %v670 = vmul.f32 %v662, 0.8007374
        %v671 = vmul.f32 %v663, 0.8007374
        %v672 = vmul.f32 %v664, 0.8007374
        %v673 = vmul.f32 %v665, 0.8007374
        %v674 = vmul.f32 %v666, 0.8007374
        %675 = vst.msk [vmem:[#allocation4] sm:$0xff] %vm225, %v667
        %676 = vst.msk [vmem:[#allocation4 + $0x8] sm:$0xff] %vm225, %v668
        %677 = vst.msk [vmem:[#allocation4 + $0x10] sm:$0xff] %vm225, %v669
        %678 = vst.msk [vmem:[#allocation4 + $0x18] sm:$0xff] %vm225, %v670
        %679 = vst.msk [vmem:[#allocation4 + $0x20] sm:$0xff] %vm225, %v671
        %680 = vst.msk [vmem:[#allocation4 + $0x28] sm:$0xff] %vm225, %v672
        %681 = vst.msk [vmem:[#allocation4 + $0x30] sm:$0xff] %vm225, %v673
        %682 = vst.msk [vmem:[#allocation4 + $0x38] sm:$0xff] %vm225, %v674
        %v683 = vld [vmem:[#allocation4] sm:$0xff]
        %v684 = vld [vmem:[#allocation4 + $0x8] sm:$0xff]
        %v685 = vld [vmem:[#allocation4 + $0x10] sm:$0xff]
        %v686 = vld [vmem:[#allocation4 + $0x18] sm:$0xff]
        %v687 = vld [vmem:[#allocation4 + $0x20] sm:$0xff]
        %v688 = vld [vmem:[#allocation4 + $0x28] sm:$0xff]
        %v689 = vld [vmem:[#allocation4 + $0x30] sm:$0xff]
        %v690 = vld [vmem:[#allocation4 + $0x38] sm:$0xff]
        %v691 = vld [vmem:[#allocation3 + $0x1] sm:$0xff]
        %v692 = vld [vmem:[#allocation3 + $0x9] sm:$0xff]
        %v693 = vld [vmem:[#allocation3 + $0x19] sm:$0xff]
        %v694 = vld [vmem:[#allocation3 + $0x21] sm:$0xff]
        %v695 = vld [vmem:[#allocation3 + $0x31] sm:$0xff]
        %v696 = vld [vmem:[#allocation3 + $0x39] sm:$0xff]
        %v697 = vld [vmem:[#allocation3 + $0x49] sm:$0xff]
        %v698 = vld [vmem:[#allocation3 + $0x51] sm:$0xff]
        %v699 = vmul.f32 %v691, 0.94595945
        %v700 = vmul.f32 %v692, 0.94595945
        %v701 = vmul.f32 %v693, 0.94595945
        %v702 = vmul.f32 %v694, 0.94595945
        %v703 = vmul.f32 %v695, 0.94595945
        %v704 = vmul.f32 %v696, 0.94595945
        %v705 = vmul.f32 %v697, 0.94595945
        %v706 = vmul.f32 %v698, 0.94595945
        %v707 = vadd.f32 %v683, %v699
        %v708 = vadd.f32 %v684, %v700
        %v709 = vadd.f32 %v685, %v701
        %v710 = vadd.f32 %v686, %v702
        %v711 = vadd.f32 %v687, %v703
        %v712 = vadd.f32 %v688, %v704
        %v713 = vadd.f32 %v689, %v705
        %v714 = vadd.f32 %v690, %v706
        %715 = vst.msk [vmem:[#allocation4] sm:$0xff] %vm225, %v707
        %716 = vst.msk [vmem:[#allocation4 + $0x8] sm:$0xff] %vm225, %v708
        %717 = vst.msk [vmem:[#allocation4 + $0x10] sm:$0xff] %vm225, %v709
        %718 = vst.msk [vmem:[#allocation4 + $0x18] sm:$0xff] %vm225, %v710
        %719 = vst.msk [vmem:[#allocation4 + $0x20] sm:$0xff] %vm225, %v711
        %720 = vst.msk [vmem:[#allocation4 + $0x28] sm:$0xff] %vm225, %v712
        %721 = vst.msk [vmem:[#allocation4 + $0x30] sm:$0xff] %vm225, %v713
        %722 = vst.msk [vmem:[#allocation4 + $0x38] sm:$0xff] %vm225, %v714
        %v723 = vld [vmem:[#allocation4] sm:$0xff]
        %v724 = vld [vmem:[#allocation4 + $0x8] sm:$0xff]
        %v725 = vld [vmem:[#allocation4 + $0x10] sm:$0xff]
        %v726 = vld [vmem:[#allocation4 + $0x18] sm:$0xff]
        %v727 = vld [vmem:[#allocation4 + $0x20] sm:$0xff]
        %v728 = vld [vmem:[#allocation4 + $0x28] sm:$0xff]
        %v729 = vld [vmem:[#allocation4 + $0x30] sm:$0xff]
        %v730 = vld [vmem:[#allocation4 + $0x38] sm:$0xff]
        %v731 = vld [vmem:[#allocation3 + $0x2] sm:$0xff]
        %v732 = vld [vmem:[#allocation3 + $0xa] sm:$0xff]
        %v733 = vld [vmem:[#allocation3 + $0x1a] sm:$0xff]
        %v734 = vld [vmem:[#allocation3 + $0x22] sm:$0xff]
        %v735 = vld [vmem:[#allocation3 + $0x32] sm:$0xff]
        %v736 = vld [vmem:[#allocation3 + $0x3a] sm:$0xff]
        %v737 = vld [vmem:[#allocation3 + $0x4a] sm:$0xff]
        %v738 = vld [vmem:[#allocation3 + $0x52] sm:$0xff]
        %v739 = vadd.f32 %v723, %v731
        %v740 = vadd.f32 %v724, %v732
        %v741 = vadd.f32 %v725, %v733
        %v742 = vadd.f32 %v726, %v734
        %v743 = vadd.f32 %v727, %v735
        %v744 = vadd.f32 %v728, %v736
        %v745 = vadd.f32 %v729, %v737
        %v746 = vadd.f32 %v730, %v738
        %747 = vst.msk [vmem:[#allocation4] sm:$0xff] %vm225, %v739
        %748 = vst.msk [vmem:[#allocation4 + $0x8] sm:$0xff] %vm225, %v740
        %749 = vst.msk [vmem:[#allocation4 + $0x10] sm:$0xff] %vm225, %v741
        %750 = vst.msk [vmem:[#allocation4 + $0x18] sm:$0xff] %vm225, %v742
        %751 = vst.msk [vmem:[#allocation4 + $0x20] sm:$0xff] %vm225, %v743
        %752 = vst.msk [vmem:[#allocation4 + $0x28] sm:$0xff] %vm225, %v744
        %753 = vst.msk [vmem:[#allocation4 + $0x30] sm:$0xff] %vm225, %v745
        %754 = vst.msk [vmem:[#allocation4 + $0x38] sm:$0xff] %vm225, %v746
        %v755 = vld [vmem:[#allocation4] sm:$0xff]
        %v756 = vld [vmem:[#allocation4 + $0x8] sm:$0xff]
        %v757 = vld [vmem:[#allocation4 + $0x10] sm:$0xff]
        %v758 = vld [vmem:[#allocation4 + $0x18] sm:$0xff]
        %v759 = vld [vmem:[#allocation4 + $0x20] sm:$0xff]
        %v760 = vld [vmem:[#allocation4 + $0x28] sm:$0xff]
        %v761 = vld [vmem:[#allocation4 + $0x30] sm:$0xff]
        %v762 = vld [vmem:[#allocation4 + $0x38] sm:$0xff]
        %v763 = vld [vmem:[#allocation3 + $0x3] sm:$0xff]
        %v764 = vld [vmem:[#allocation3 + $0xb] sm:$0xff]
        %v765 = vld [vmem:[#allocation3 + $0x1b] sm:$0xff]
        %v766 = vld [vmem:[#allocation3 + $0x23] sm:$0xff]
        %v767 = vld [vmem:[#allocation3 + $0x33] sm:$0xff]
        %v768 = vld [vmem:[#allocation3 + $0x3b] sm:$0xff]
        %v769 = vld [vmem:[#allocation3 + $0x4b] sm:$0xff]
        %v770 = vld [vmem:[#allocation3 + $0x53] sm:$0xff]
        %v771 = vmul.f32 %v763, 0.94595945
        %v772 = vmul.f32 %v764, 0.94595945
        %v773 = vmul.f32 %v765, 0.94595945
        %v774 = vmul.f32 %v766, 0.94595945
        %v775 = vmul.f32 %v767, 0.94595945
        %v776 = vmul.f32 %v768, 0.94595945
        %v777 = vmul.f32 %v769, 0.94595945
        %v778 = vmul.f32 %v770, 0.94595945
        %v779 = vadd.f32 %v755, %v771
        %v780 = vadd.f32 %v756, %v772
        %v781 = vadd.f32 %v757, %v773
        %v782 = vadd.f32 %v758, %v774
        %v783 = vadd.f32 %v759, %v775
        %v784 = vadd.f32 %v760, %v776
        %v785 = vadd.f32 %v761, %v777
        %v786 = vadd.f32 %v762, %v778
        %787 = vst.msk [vmem:[#allocation4] sm:$0xff] %vm225, %v779
        %788 = vst.msk [vmem:[#allocation4 + $0x8] sm:$0xff] %vm225, %v780
        %789 = vst.msk [vmem:[#allocation4 + $0x10] sm:$0xff] %vm225, %v781
        %790 = vst.msk [vmem:[#allocation4 + $0x18] sm:$0xff] %vm225, %v782
        %791 = vst.msk [vmem:[#allocation4 + $0x20] sm:$0xff] %vm225, %v783
        %792 = vst.msk [vmem:[#allocation4 + $0x28] sm:$0xff] %vm225, %v784
        %793 = vst.msk [vmem:[#allocation4 + $0x30] sm:$0xff] %vm225, %v785
        %794 = vst.msk [vmem:[#allocation4 + $0x38] sm:$0xff] %vm225, %v786
        %v795 = vld [vmem:[#allocation4] sm:$0xff]
        %v796 = vld [vmem:[#allocation4 + $0x8] sm:$0xff]
        %v797 = vld [vmem:[#allocation4 + $0x10] sm:$0xff]
        %v798 = vld [vmem:[#allocation4 + $0x18] sm:$0xff]
        %v799 = vld [vmem:[#allocation4 + $0x20] sm:$0xff]
        %v800 = vld [vmem:[#allocation4 + $0x28] sm:$0xff]
        %v801 = vld [vmem:[#allocation4 + $0x30] sm:$0xff]
        %v802 = vld [vmem:[#allocation4 + $0x38] sm:$0xff]
        %v803 = vld [vmem:[#allocation3 + $0x4] sm:$0xff]
        %v804 = vld [vmem:[#allocation3 + $0xc] sm:$0xff]
        %v805 = vld [vmem:[#allocation3 + $0x1c] sm:$0xff]
        %v806 = vld [vmem:[#allocation3 + $0x24] sm:$0xff]
        %v807 = vld [vmem:[#allocation3 + $0x34] sm:$0xff]
        %v808 = vld [vmem:[#allocation3 + $0x3c] sm:$0xff]
        %v809 = vld [vmem:[#allocation3 + $0x4c] sm:$0xff]
        %v810 = vld [vmem:[#allocation3 + $0x54] sm:$0xff]
        %v811 = vmul.f32 %v803, 0.8007374
        %v812 = vmul.f32 %v804, 0.8007374
        %v813 = vmul.f32 %v805, 0.8007374
        %v814 = vmul.f32 %v806, 0.8007374
        %v815 = vmul.f32 %v807, 0.8007374
        %v816 = vmul.f32 %v808, 0.8007374
        %v817 = vmul.f32 %v809, 0.8007374
        %v818 = vmul.f32 %v810, 0.8007374
        %v819 = vadd.f32 %v795, %v811
        %v820 = vadd.f32 %v796, %v812
        %v821 = vadd.f32 %v797, %v813
        %v822 = vadd.f32 %v798, %v814
        %v823 = vadd.f32 %v799, %v815
        %v824 = vadd.f32 %v800, %v816
        %v825 = vadd.f32 %v801, %v817
        %v826 = vadd.f32 %v802, %v818
        %827 = vst.msk [vmem:[#allocation4] sm:$0xff] %vm225, %v819
        %828 = vst.msk [vmem:[#allocation4 + $0x8] sm:$0xff] %vm225, %v820
        %829 = vst.msk [vmem:[#allocation4 + $0x10] sm:$0xff] %vm225, %v821
        %830 = vst.msk [vmem:[#allocation4 + $0x18] sm:$0xff] %vm225, %v822
        %831 = vst.msk [vmem:[#allocation4 + $0x20] sm:$0xff] %vm225, %v823
        %832 = vst.msk [vmem:[#allocation4 + $0x28] sm:$0xff] %vm225, %v824
        %833 = vst.msk [vmem:[#allocation4 + $0x30] sm:$0xff] %vm225, %v825
        %834 = vst.msk [vmem:[#allocation4 + $0x38] sm:$0xff] %vm225, %v826
        %v835 = vld [vmem:[#allocation4] sm:$0xff]
        %v836 = vld [vmem:[#allocation4 + $0x8] sm:$0xff]
        %v837 = vld [vmem:[#allocation4 + $0x10] sm:$0xff]
        %v838 = vld [vmem:[#allocation4 + $0x18] sm:$0xff]
        %v839 = vld [vmem:[#allocation4 + $0x20] sm:$0xff]
        %v840 = vld [vmem:[#allocation4 + $0x28] sm:$0xff]
        %v841 = vld [vmem:[#allocation4 + $0x30] sm:$0xff]
        %v842 = vld [vmem:[#allocation4 + $0x38] sm:$0xff]
        %843 = vst.msk [vmem:[%s135] sm:$0xff] %vm225, %v835
        %844 = vst.msk [vmem:[%s135 + $0x8] sm:$0xff] %vm225, %v836
        %845 = vst.msk [vmem:[%s135 + $0x10] sm:$0xff] %vm225, %v837
        %846 = vst.msk [vmem:[%s135 + $0x18] sm:$0xff] %vm225, %v838
        %847 = vst.msk [vmem:[%s135 + $0x20] sm:$0xff] %vm225, %v839
        %848 = vst.msk [vmem:[%s135 + $0x28] sm:$0xff] %vm225, %v840
        %849 = vst.msk [vmem:[%s135 + $0x30] sm:$0xff] %vm225, %v841
        %850 = vst.msk [vmem:[%s135 + $0x38] sm:$0xff] %vm225, %v842
        %s851 = sand.u32 %s52, 1
        %s852 = scalar_lea.sflag [#allocation7], %s851
        %s853 = sand.u32 %s52, 1
        %s854 = smul.addr %s853, 64
        %s855 = scalar_lea.vmem [#allocation8], %s854
        // Predicated region
        $region29: #{tpu_custom_call.1} parent=23 // pred_check
          %p856 = pneg %p62
        $region30: #{tpu_custom_call.1} parent=23 // pred_check_branch
          %858 = sbr.rel (%p856) target = $region32
        $region31: #{tpu_custom_call.1} parent=23 // pred_region
          %s859 = smul.u32 4, %s18
          %s861 = ssub.s32 1024, 1024
          %862 = vsyncadd %s852, %s861
          %s863 = smul.addr %s859, 2
          %s864 = smul.addr %s863, 128
          %s865 = scalar_lea.hbm %s1, %s864
          %s866 = sshll.u32 %s855, 4
          %s867 = int_to_ptr.vmem [resolvable:$true] %s866
          %872 = dma.vmem_to_hbm [thread:$0]  %s867, 1024, %s865, %s852, 128, 128, 8
        $region32: #{tpu_custom_call.1} parent=23 // pred_fallthru
          _
      $region24: #{tpu_custom_call.1} parent=5 // pred_fallthru
        _
      %p873 = scmp.le.s32.totalorder 2, %s13
      // Predicated region
      $region33: #{tpu_custom_call.1} parent=5 // pred_check
        %p874 = pneg %p873
      $region34: #{tpu_custom_call.1} parent=5 // pred_check_branch
        %876 = sbr.rel (%p874) target = $region36
      $region35: #{tpu_custom_call.1} parent=5 // pred_region
        %s877 = ssub.s32 %s13, 2
        // Predicated region
        $region37: #{tpu_custom_call.1} parent=35 // pred_check
          %p878 = pneg %p68
        $region38: #{tpu_custom_call.1} parent=35 // pred_check_branch
          %880 = sbr.rel (%p878) target = $region40
        $region39: #{tpu_custom_call.1} parent=35 // pred_region
          %s881 = sand.u32 %s53, 1
          %s882 = scalar_lea.sflag [#allocation7], %s881
          %s883 = sand.u32 %s53, 1
          %s884 = smul.addr %s883, 64
          %s885 = scalar_lea.vmem [#allocation8], %s884
          %886 = dma.done %s882, 1024
        $region40: #{tpu_custom_call.1} parent=35 // pred_fallthru
          _
      $region36: #{tpu_custom_call.1} parent=5 // pred_fallthru
        _
    $region6: #{tpu_custom_call.1} parent=1 // loop_footer
      %s17 = sadd.s32 1, %s13
    $region7: #{tpu_custom_call.1} parent=1 // loop_footer_branch
      %12 = sbr.rel target = $region3
    $region8: #{tpu_custom_call.1} parent=1 // loop_exit
      _
    %887 = vsyncpa [#allocation6], 1
    %s888 = scalar_lea.sflag [#allocation6], 1
    %889 = vsyncpa %s888, 1
    %890 = vsyncpa [#allocation7], 1
    %s891 = scalar_lea.sflag [#allocation7], 1
    %892 = vsyncpa %s891, 1

</llo_original>
